<compile_context>
chip_gen: v7x
topology: tpu7x:2x2x1
jax: 0.10.0
libtpu: 0.0.40
codegen_flags: <defaults>
</compile_context>

<pallas_src>
import functools
import math

import jax
import jax.numpy as jnp
from jax import lax
from jax.experimental import pallas as pl
from jax.experimental.pallas import tpu as pltpu

BN_EPS = 1e-5
_INV_SQRT2 = 1.0 / math.sqrt(2.0)
_VPU_CIN_MAX = 32          # Cin at or below this -> broadcast-MAC on the VPU


def _gelu_exact(x):
    """Exact (erf-form) GELU, matching torch.nn.GELU() default."""
    return 0.5 * x * (1.0 + lax.erf(x * _INV_SQRT2))


def _vmem_budget():
    """Generation-aware (budget for a single tile, scoped VMEM limit)."""
    try:
        cap = int(pltpu.get_tpu_info().vmem_capacity_bytes)
    except Exception:            # no device / API unavailable -> conservative v7x
        cap = 64 << 20
    budget = min(cap // 5, 32 << 20)        # ~26 MiB on v5e/v6e, ~13 MiB on v7x
    vmem_limit = min(cap * 3 // 4, 128 << 20)
    return budget, int(vmem_limit)


def _pick_tile(hw_pad, per_pixel_bytes, fixed_bytes, budget_bytes):
    """Largest 128-multiple pixel tile dividing hw_pad fitting the VMEM budget."""
    assert hw_pad % 128 == 0
    avail = max(budget_bytes - fixed_bytes, per_pixel_bytes * 128)
    max_pt = max(128, avail // max(per_pixel_bytes, 1))
    best, cand = 128, 128
    while cand <= hw_pad:
        if hw_pad % cand == 0 and cand <= max_pt:
            best = cand
        cand += 128
    return best


def _conv1_gelu(x_refs, w1_ref, b1_ref, xstack_ref, channels, use_mxu):
    """GELU(1x1-conv(x) + b1) with pixels in lanes -> f32 [C, pt]."""
    pt = x_refs[0].shape[-1]
    if use_mxu:
        # Stack the F feature tiles into one contiguous [Cin, pt] scratch and
        # issue a single K=Cin matmul (native dtype operands, f32 accumulate).
        for f, x_ref in enumerate(x_refs):
            xstack_ref[f * channels:(f + 1) * channels, :] = x_ref[...]
        h = jnp.dot(w1_ref[...], xstack_ref[...],
                    preferred_element_type=jnp.float32)             # [C, pt]
    else:
        # Tiny Cin: pure-VPU broadcast-MAC loop (MXU would be mostly padding).
        w1 = w1_ref[...].astype(jnp.float32)                         # [C, Cin]
        h = None
        for f, x_ref in enumerate(x_refs):
            xf = x_ref[...].astype(jnp.float32)                      # [channels, pt]
            for j in range(channels):
                k = f * channels + j
                xrow = jnp.broadcast_to(xf[j:j + 1, :], (channels, pt))
                term = w1[:, k:k + 1] * xrow
                h = term if h is None else h + term
    h = h + b1_ref[...].astype(jnp.float32)                          # [C,1] bcast
    return _gelu_exact(h)


def _stats_kernel(*refs, numfeatures, channels, use_mxu):
    """Pass 1: spill h = GELU(conv1(x)) and accumulate per-channel sum / ssq."""
    x_refs = refs[:numfeatures]
    if use_mxu:
        w1_ref, b1_ref, h_out_ref, sum_ref, ssq_ref, xstack_ref = refs[numfeatures:]
    else:
        (w1_ref, b1_ref, h_out_ref, sum_ref, ssq_ref), xstack_ref = refs[numfeatures:], None

    h = _conv1_gelu(x_refs, w1_ref, b1_ref, xstack_ref, channels, use_mxu)  # [C,pt] f32
    h_out_ref[...] = h.astype(h_out_ref.dtype)                      # spill (lane-dense)

    psum = jnp.sum(h, axis=1, keepdims=True)                         # [C, 1]
    pssq = jnp.sum(h * h, axis=1, keepdims=True)                     # [C, 1]

    # program_id(0) is the (parallel) core axis: each core owns its accumulator.
    is_first = jnp.logical_and(pl.program_id(1) == 0, pl.program_id(2) == 0)

    @pl.when(is_first)
    def _():
        sum_ref[...] = psum
        ssq_ref[...] = pssq

    @pl.when(jnp.logical_not(is_first))
    def _():
        sum_ref[...] = sum_ref[...] + psum
        ssq_ref[...] = ssq_ref[...] + pssq


def _apply_kernel(h_ref, w2_ref, b2_ref, o_ref):
    """Pass 2: read spilled h only; BN folded into classifier; lane-dense out."""
    h = h_ref[...].astype(jnp.float32)                               # [C, pt]
    o = jnp.sum(h * w2_ref[...], axis=0, keepdims=True) + b2_ref[0]  # [1, pt]
    o_ref[...] = o.astype(o_ref.dtype)


def segformer_binary_head(xs, params, *, spill_dtype=None, force_mxu=None):
    """xs: list of NCHW arrays [B, channels, H, W]; returns NCHW [B, 1, H, W].

    spill_dtype: dtype used to spill h=GELU(conv1(x)) to HBM between passes
      (None -> input dtype; use jnp.bfloat16 in production to cut pass-2 HBM
      traffic in half).
    """
    numfeatures = len(xs)
    B, channels, H, W = xs[0].shape
    HW = H * W
    cin = channels * numfeatures
    xdtype = xs[0].dtype
    spill_dtype = xdtype if spill_dtype is None else jnp.dtype(spill_dtype)
    use_mxu = (cin > _VPU_CIN_MAX) if force_mxu is None else bool(force_mxu)

    # Free reshapes (contiguous NCHW -> [B, C, H*W]): pixels land in lanes.
    # Pad the pixel axis to a multiple of 128 so every tile is lane-aligned.
    HW_pad = ((HW + 127) // 128) * 128
    xs_flat = [x.reshape(B, channels, HW) for x in xs]
    if HW_pad != HW:
        xs_flat = [jnp.pad(x, ((0, 0), (0, 0), (0, HW_pad - HW))) for x in xs_flat]

    x_item = jnp.dtype(xdtype).itemsize
    sp_item = jnp.dtype(spill_dtype).itemsize

    # VMEM-complete accounting for one tile (pass 1 dominates): double-buffered
    # inputs + double-buffered spilled-h output + f32 intermediate (+ scratch).
    per_pixel = 2 * numfeatures * channels * x_item \
        + 2 * channels * sp_item + channels * 4 \
        + (cin * x_item if use_mxu else 0)
    fixed = 2 * channels * cin * x_item + 8 * channels * 4 + (1 << 16)
    budget, vmem_limit = _vmem_budget()
    pt = _pick_tile(HW_pad, per_pixel, fixed, budget)
    nt = HW_pad // pt

    # ---- megacore split of pass 1 (leading "parallel" core axis) ------------
    if nt % 2 == 0 and nt >= 2:
        ncores, nt_core, b_core = 2, nt // 2, B

        def xmap(c, b, p):                       # split pixel tiles across cores
            return (b, 0, c * nt_core + p)
    elif B % 2 == 0:
        ncores, nt_core, b_core = 2, nt, B // 2

        def xmap(c, b, p):                       # split batch across cores
            return (c * b_core + b, 0, p)
    else:
        ncores, nt_core, b_core = 1, nt, B

        def xmap(c, b, p):
            return (b, 0, p)

    grid1 = (ncores, b_core, nt_core)

    x_specs = [pl.BlockSpec((None, channels, pt), xmap) for _ in range(numfeatures)]
    w1_spec = pl.BlockSpec((channels, cin), lambda c, b, p: (0, 0))
    b1_spec = pl.BlockSpec((channels, 1), lambda c, b, p: (0, 0))
    h_spec = pl.BlockSpec((None, channels, pt), xmap)
    acc_spec = pl.BlockSpec((None, channels, 1), lambda c, b, p: (c, 0, 0))
    scratch1 = [pltpu.VMEM((cin, pt), xdtype)] if use_mxu else []

    w1 = params["w1t"].astype(xdtype)                                # [C, Cin]
    b1 = params["b1"].astype(jnp.float32).reshape(channels, 1)

    # ---- pass 1: spill h and accumulate per-core per-channel sum / ssq ------
    h_full, psums, pssqs = pl.pallas_call(
        functools.partial(_stats_kernel, numfeatures=numfeatures,
                          channels=channels, use_mxu=use_mxu),
        grid=grid1,
        in_specs=x_specs + [w1_spec, b1_spec],
        out_specs=[h_spec, acc_spec, acc_spec],
        out_shape=[jax.ShapeDtypeStruct((B, channels, HW_pad), spill_dtype),
                   jax.ShapeDtypeStruct((ncores, channels, 1), jnp.float32),
                   jax.ShapeDtypeStruct((ncores, channels, 1), jnp.float32)],
        scratch_shapes=scratch1,
        compiler_params=pltpu.CompilerParams(
            dimension_semantics=("parallel", "arbitrary", "arbitrary"),
            vmem_limit_bytes=vmem_limit),
    )(*xs_flat, w1, b1)

    # ---- fold training-mode BatchNorm into the classifier (in the wrapper) --
    sums = jnp.sum(psums[:, :, 0], axis=0)                           # [C]
    ssqs = jnp.sum(pssqs[:, :, 0], axis=0)                           # [C]
    n_pad = B * (HW_pad - HW)
    if n_pad:
        # padded pixels contribute exactly GELU(b1) per channel -> remove them
        hpad = _gelu_exact(params["b1"].astype(jnp.float32))         # [C]
        sums = sums - n_pad * hpad
        ssqs = ssqs - n_pad * hpad * hpad
    n_total = float(B * HW)
    mean = sums / n_total
    var = jnp.maximum(ssqs / n_total - mean * mean, 0.0)             # biased var
    # TODO(synk): for very large B*H*W, use Welford/two-pass stats to avoid
    # E[h^2]-E[h]^2 cancellation; per-core partials already reduce drift.
    scale = params["gamma"] * lax.rsqrt(var + BN_EPS)                # [C]
    shift = params["beta"] - mean * scale                            # [C]
    w2_eff = (params["w2"] * scale).astype(jnp.float32).reshape(channels, 1)
    b2_eff = (params["b2"] + jnp.dot(shift, params["w2"])).astype(jnp.float32).reshape(1)

    # ---- pass 2: read only the spilled h, folded BN + classifier ------------
    out = pl.pallas_call(
        _apply_kernel,
        grid=(B, nt),
        in_specs=[pl.BlockSpec((None, channels, pt), lambda b, p: (b, 0, p)),
                  pl.BlockSpec((channels, 1), lambda b, p: (0, 0)),
                  pl.BlockSpec(memory_space=pltpu.MemorySpace.SMEM)],
        out_specs=pl.BlockSpec((None, 1, pt), lambda b, p: (b, 0, p)),
        out_shape=jax.ShapeDtypeStruct((B, 1, HW_pad), xdtype),
        compiler_params=pltpu.CompilerParams(
            dimension_semantics=("parallel", "parallel"),
            vmem_limit_bytes=vmem_limit),
    )(h_full, w2_eff, b2_eff)

    return out[:, :, :HW].reshape(B, 1, H, W)


def init_params(key, channels, numfeatures):
    cin = channels * numfeatures
    k1, k2, k3, k4 = jax.random.split(key, 4)
    return {
        # conv1 weight stored as [Cout, Cin] for the pixels-in-lanes contraction
        "w1t": 0.1 * jax.random.normal(k1, (channels, cin), jnp.float32),
        "b1": 0.1 * jax.random.normal(k2, (channels,), jnp.float32),
        "gamma": jnp.ones((channels,), jnp.float32),
        "beta": jnp.zeros((channels,), jnp.float32),
        "w2": 0.1 * jax.random.normal(k3, (channels,), jnp.float32),
        "b2": 0.1 * jax.random.normal(k4, (), jnp.float32),
    }


def _reference(xs, params):
    """Pure-JAX reference with identical semantics (NCHW, training-mode BN)."""
    x = jnp.concatenate(xs, axis=1)                                  # [B, Cin, H, W]
    C = params["w1t"].shape[0]
    h = jnp.einsum("oc,bchw->bohw", params["w1t"], x,
                   precision=lax.Precision.HIGHEST)
    h = h + params["b1"].reshape(1, C, 1, 1)
    h = _gelu_exact(h)
    mean = jnp.mean(h, axis=(0, 2, 3), keepdims=True)
    var = jnp.mean((h - mean) ** 2, axis=(0, 2, 3), keepdims=True)
    h = (h - mean) / jnp.sqrt(var + BN_EPS)
    h = h * params["gamma"].reshape(1, C, 1, 1) + params["beta"].reshape(1, C, 1, 1)
    o = jnp.einsum("c,bchw->bhw", params["w2"], h,
                   precision=lax.Precision.HIGHEST)[:, None] + params["b2"]
    return o


if __name__ == "__main__":
    channels, numfeatures = 4, 3
    B, H, W = 2, 16, 16

    key = jax.random.PRNGKey(0)
    kx, kp = jax.random.split(key)
    xs = [jax.random.normal(k, (B, channels, H, W), jnp.float32)
          for k in jax.random.split(kx, numfeatures)]
    params = init_params(kp, channels, numfeatures)
    ref = _reference(xs, params)

    # (a) default path: VPU conv (Cin=12), spill h in the input dtype (f32).
    out = jax.block_until_ready(segformer_binary_head(xs, params))
    assert out.shape == (B, 1, H, W)
    assert jnp.allclose(out, ref, atol=1e-3, rtol=1e-3), "mismatch vs reference (f32 spill)"

    # (b) production setting from the perf review: spill h in bf16 (pass 2
    #     reads half the bytes).  Looser tolerance due to bf16 rounding of h.
    out_bf16 = jax.block_until_ready(
        segformer_binary_head(xs, params, spill_dtype=jnp.bfloat16))
    assert jnp.allclose(out_bf16, ref, atol=3e-2, rtol=3e-2), "mismatch (bf16 spill)"

    # (c) stacked K=Cin MXU path + non-128-multiple spatial size (exercises the
    #     zero-pad + analytic stats correction and the per-core batch split).
    H2 = W2 = 12
    xs2 = [jax.random.normal(k, (B, channels, H2, W2), jnp.float32)
           for k in jax.random.split(jax.random.PRNGKey(1), numfeatures)]
    ref2 = _reference(xs2, params)
    out2 = jax.block_until_ready(
        segformer_binary_head(xs2, params, force_mxu=True))
    assert out2.shape == (B, 1, H2, W2)
    assert jnp.allclose(out2, ref2, atol=1e-3, rtol=1e-3), "mismatch vs reference (MXU path)"

    print("KERNEL_OK")
</pallas_src>

<mosaic_0001>
module attributes {stable_mosaic.version = 11 : i64} {
  func.func @_stats_kernel(%arg0: i32, %arg1: i32, %arg2: i32, %arg3: memref<1x4x256xf32, #tpu.memory_space<vmem>>, %arg4: memref<1x4x256xf32, #tpu.memory_space<vmem>>, %arg5: memref<1x4x256xf32, #tpu.memory_space<vmem>>, %arg6: memref<4x12xf32, #tpu.memory_space<vmem>>, %arg7: memref<4x1xf32, #tpu.memory_space<vmem>>, %arg8: memref<1x4x256xf32, #tpu.memory_space<vmem>>, %arg9: memref<1x4x1xf32, #tpu.memory_space<vmem>>, %arg10: memref<1x4x1xf32, #tpu.memory_space<vmem>>) attributes {dimension_semantics = [#tpu.dimension_semantics<parallel>, #tpu.dimension_semantics<arbitrary>, #tpu.dimension_semantics<arbitrary>], iteration_bounds = array<i64: 2, 1, 1>, scalar_prefetch = 0 : i64, scratch_operands = 0 : i64, tpu.core_type = #tpu.core_type<tc>, window_params = [{transform_indices = @transform_0, window_bounds = array<i64: 1, 4, 256>}, {transform_indices = @transform_1, window_bounds = array<i64: 1, 4, 256>}, {transform_indices = @transform_2, window_bounds = array<i64: 1, 4, 256>}, {pipeline_mode = #tpu.pipeline_mode<synchronous>, transform_indices = @transform_3, window_bounds = array<i64: 4, 12>}, {pipeline_mode = #tpu.pipeline_mode<synchronous>, transform_indices = @transform_4, window_bounds = array<i64: 4, 1>}, {transform_indices = @transform_5, window_bounds = array<i64: 1, 4, 256>}, {transform_indices = @transform_6, window_bounds = array<i64: 1, 4, 1>}, {transform_indices = @transform_7, window_bounds = array<i64: 1, 4, 1>}]} {
    %c0 = arith.constant 0 : index
    %c0_0 = arith.constant 0 : index
    %0 = vector.load %arg6[%c0, %c0_0] : memref<4x12xf32, #tpu.memory_space<vmem>>, vector<4x12xf32>
    %c0_1 = arith.constant 0 : index
    %c0_2 = arith.constant 0 : index
    %c0_3 = arith.constant 0 : index
    %1 = vector.load %arg3[%c0_1, %c0_2, %c0_3] : memref<1x4x256xf32, #tpu.memory_space<vmem>>, vector<1x4x256xf32>
    %2 = vector.shape_cast %1 : vector<1x4x256xf32> to vector<4x256xf32>
    %3 = vector.extract_strided_slice %2 {offsets = [0, 0], sizes = [1, 256], strides = [1, 1]} : vector<4x256xf32> to vector<1x256xf32>
    %4 = vector.shape_cast %3 : vector<1x256xf32> to vector<1x256xf32>
    %5 = vector.broadcast %4 : vector<1x256xf32> to vector<4x256xf32>
    %6 = vector.extract_strided_slice %0 {offsets = [0, 0], sizes = [4, 1], strides = [1, 1]} : vector<4x12xf32> to vector<4x1xf32>
    %7 = vector.broadcast %6 : vector<4x1xf32> to vector<4x256xf32>
    %8 = arith.mulf %7, %5 : vector<4x256xf32>
    %9 = vector.extract_strided_slice %2 {offsets = [1, 0], sizes = [1, 256], strides = [1, 1]} : vector<4x256xf32> to vector<1x256xf32>
    %10 = vector.shape_cast %9 : vector<1x256xf32> to vector<1x256xf32>
    %11 = vector.broadcast %10 : vector<1x256xf32> to vector<4x256xf32>
    %12 = vector.extract_strided_slice %0 {offsets = [0, 1], sizes = [4, 1], strides = [1, 1]} : vector<4x12xf32> to vector<4x1xf32>
    %13 = vector.broadcast %12 : vector<4x1xf32> to vector<4x256xf32>
    %14 = arith.mulf %13, %11 : vector<4x256xf32>
    %15 = arith.addf %8, %14 : vector<4x256xf32>
    %16 = vector.extract_strided_slice %2 {offsets = [2, 0], sizes = [1, 256], strides = [1, 1]} : vector<4x256xf32> to vector<1x256xf32>
    %17 = vector.shape_cast %16 : vector<1x256xf32> to vector<1x256xf32>
    %18 = vector.broadcast %17 : vector<1x256xf32> to vector<4x256xf32>
    %19 = vector.extract_strided_slice %0 {offsets = [0, 2], sizes = [4, 1], strides = [1, 1]} : vector<4x12xf32> to vector<4x1xf32>
    %20 = vector.broadcast %19 : vector<4x1xf32> to vector<4x256xf32>
    %21 = arith.mulf %20, %18 : vector<4x256xf32>
    %22 = arith.addf %15, %21 : vector<4x256xf32>
    %23 = vector.extract_strided_slice %2 {offsets = [3, 0], sizes = [1, 256], strides = [1, 1]} : vector<4x256xf32> to vector<1x256xf32>
    %24 = vector.shape_cast %23 : vector<1x256xf32> to vector<1x256xf32>
    %25 = vector.broadcast %24 : vector<1x256xf32> to vector<4x256xf32>
    %26 = vector.extract_strided_slice %0 {offsets = [0, 3], sizes = [4, 1], strides = [1, 1]} : vector<4x12xf32> to vector<4x1xf32>
    %27 = vector.broadcast %26 : vector<4x1xf32> to vector<4x256xf32>
    %28 = arith.mulf %27, %25 : vector<4x256xf32>
    %29 = arith.addf %22, %28 : vector<4x256xf32>
    %c0_4 = arith.constant 0 : index
    %c0_5 = arith.constant 0 : index
    %c0_6 = arith.constant 0 : index
    %30 = vector.load %arg4[%c0_4, %c0_5, %c0_6] : memref<1x4x256xf32, #tpu.memory_space<vmem>>, vector<1x4x256xf32>
    %31 = vector.shape_cast %30 : vector<1x4x256xf32> to vector<4x256xf32>
    %32 = vector.extract_strided_slice %31 {offsets = [0, 0], sizes = [1, 256], strides = [1, 1]} : vector<4x256xf32> to vector<1x256xf32>
    %33 = vector.shape_cast %32 : vector<1x256xf32> to vector<1x256xf32>
    %34 = vector.broadcast %33 : vector<1x256xf32> to vector<4x256xf32>
    %35 = vector.extract_strided_slice %0 {offsets = [0, 4], sizes = [4, 1], strides = [1, 1]} : vector<4x12xf32> to vector<4x1xf32>
    %36 = vector.broadcast %35 : vector<4x1xf32> to vector<4x256xf32>
    %37 = arith.mulf %36, %34 : vector<4x256xf32>
    %38 = arith.addf %29, %37 : vector<4x256xf32>
    %39 = vector.extract_strided_slice %31 {offsets = [1, 0], sizes = [1, 256], strides = [1, 1]} : vector<4x256xf32> to vector<1x256xf32>
    %40 = vector.shape_cast %39 : vector<1x256xf32> to vector<1x256xf32>
    %41 = vector.broadcast %40 : vector<1x256xf32> to vector<4x256xf32>
    %42 = vector.extract_strided_slice %0 {offsets = [0, 5], sizes = [4, 1], strides = [1, 1]} : vector<4x12xf32> to vector<4x1xf32>
    %43 = vector.broadcast %42 : vector<4x1xf32> to vector<4x256xf32>
    %44 = arith.mulf %43, %41 : vector<4x256xf32>
    %45 = arith.addf %38, %44 : vector<4x256xf32>
    %46 = vector.extract_strided_slice %31 {offsets = [2, 0], sizes = [1, 256], strides = [1, 1]} : vector<4x256xf32> to vector<1x256xf32>
    %47 = vector.shape_cast %46 : vector<1x256xf32> to vector<1x256xf32>
    %48 = vector.broadcast %47 : vector<1x256xf32> to vector<4x256xf32>
    %49 = vector.extract_strided_slice %0 {offsets = [0, 6], sizes = [4, 1], strides = [1, 1]} : vector<4x12xf32> to vector<4x1xf32>
    %50 = vector.broadcast %49 : vector<4x1xf32> to vector<4x256xf32>
    %51 = arith.mulf %50, %48 : vector<4x256xf32>
    %52 = arith.addf %45, %51 : vector<4x256xf32>
    %53 = vector.extract_strided_slice %31 {offsets = [3, 0], sizes = [1, 256], strides = [1, 1]} : vector<4x256xf32> to vector<1x256xf32>
    %54 = vector.shape_cast %53 : vector<1x256xf32> to vector<1x256xf32>
    %55 = vector.broadcast %54 : vector<1x256xf32> to vector<4x256xf32>
    %56 = vector.extract_strided_slice %0 {offsets = [0, 7], sizes = [4, 1], strides = [1, 1]} : vector<4x12xf32> to vector<4x1xf32>
    %57 = vector.broadcast %56 : vector<4x1xf32> to vector<4x256xf32>
    %58 = arith.mulf %57, %55 : vector<4x256xf32>
    %59 = arith.addf %52, %58 : vector<4x256xf32>
    %c0_7 = arith.constant 0 : index
    %c0_8 = arith.constant 0 : index
    %c0_9 = arith.constant 0 : index
    %60 = vector.load %arg5[%c0_7, %c0_8, %c0_9] : memref<1x4x256xf32, #tpu.memory_space<vmem>>, vector<1x4x256xf32>
    %61 = vector.shape_cast %60 : vector<1x4x256xf32> to vector<4x256xf32>
    %62 = vector.extract_strided_slice %61 {offsets = [0, 0], sizes = [1, 256], strides = [1, 1]} : vector<4x256xf32> to vector<1x256xf32>
    %63 = vector.shape_cast %62 : vector<1x256xf32> to vector<1x256xf32>
    %64 = vector.broadcast %63 : vector<1x256xf32> to vector<4x256xf32>
    %65 = vector.extract_strided_slice %0 {offsets = [0, 8], sizes = [4, 1], strides = [1, 1]} : vector<4x12xf32> to vector<4x1xf32>
    %66 = vector.broadcast %65 : vector<4x1xf32> to vector<4x256xf32>
    %67 = arith.mulf %66, %64 : vector<4x256xf32>
    %68 = arith.addf %59, %67 : vector<4x256xf32>
    %69 = vector.extract_strided_slice %61 {offsets = [1, 0], sizes = [1, 256], strides = [1, 1]} : vector<4x256xf32> to vector<1x256xf32>
    %70 = vector.shape_cast %69 : vector<1x256xf32> to vector<1x256xf32>
    %71 = vector.broadcast %70 : vector<1x256xf32> to vector<4x256xf32>
    %72 = vector.extract_strided_slice %0 {offsets = [0, 9], sizes = [4, 1], strides = [1, 1]} : vector<4x12xf32> to vector<4x1xf32>
    %73 = vector.broadcast %72 : vector<4x1xf32> to vector<4x256xf32>
    %74 = arith.mulf %73, %71 : vector<4x256xf32>
    %75 = arith.addf %68, %74 : vector<4x256xf32>
    %76 = vector.extract_strided_slice %61 {offsets = [2, 0], sizes = [1, 256], strides = [1, 1]} : vector<4x256xf32> to vector<1x256xf32>
    %77 = vector.shape_cast %76 : vector<1x256xf32> to vector<1x256xf32>
    %78 = vector.broadcast %77 : vector<1x256xf32> to vector<4x256xf32>
    %79 = vector.extract_strided_slice %0 {offsets = [0, 10], sizes = [4, 1], strides = [1, 1]} : vector<4x12xf32> to vector<4x1xf32>
    %80 = vector.broadcast %79 : vector<4x1xf32> to vector<4x256xf32>
    %81 = arith.mulf %80, %78 : vector<4x256xf32>
    %82 = arith.addf %75, %81 : vector<4x256xf32>
    %83 = vector.extract_strided_slice %61 {offsets = [3, 0], sizes = [1, 256], strides = [1, 1]} : vector<4x256xf32> to vector<1x256xf32>
    %84 = vector.shape_cast %83 : vector<1x256xf32> to vector<1x256xf32>
    %85 = vector.broadcast %84 : vector<1x256xf32> to vector<4x256xf32>
    %86 = vector.extract_strided_slice %0 {offsets = [0, 11], sizes = [4, 1], strides = [1, 1]} : vector<4x12xf32> to vector<4x1xf32>
    %87 = vector.broadcast %86 : vector<4x1xf32> to vector<4x256xf32>
    %88 = arith.mulf %87, %85 : vector<4x256xf32>
    %89 = arith.addf %82, %88 : vector<4x256xf32>
    %c0_10 = arith.constant 0 : index
    %c0_11 = arith.constant 0 : index
    %90 = vector.load %arg7[%c0_10, %c0_11] : memref<4x1xf32, #tpu.memory_space<vmem>>, vector<4x1xf32>
    %91 = vector.broadcast %90 : vector<4x1xf32> to vector<4x256xf32>
    %92 = arith.addf %89, %91 : vector<4x256xf32>
    %cst = arith.constant 5.000000e-01 : f32
    %93 = vector.broadcast %cst : f32 to vector<4x256xf32>
    %94 = arith.mulf %93, %92 : vector<4x256xf32>
    %cst_12 = arith.constant 0.707106769 : f32
    %95 = vector.broadcast %cst_12 : f32 to vector<4x256xf32>
    %96 = arith.mulf %92, %95 : vector<4x256xf32>
    %97 = math.erf %96 : vector<4x256xf32>
    %cst_13 = arith.constant 1.000000e+00 : f32
    %98 = vector.broadcast %cst_13 : f32 to vector<4x256xf32>
    %99 = arith.addf %98, %97 : vector<4x256xf32>
    %100 = arith.mulf %94, %99 : vector<4x256xf32>
    %c0_14 = arith.constant 0 : index
    %c0_15 = arith.constant 0 : index
    %c0_16 = arith.constant 0 : index
    %101 = vector.load %arg8[%c0_14, %c0_15, %c0_16] : memref<1x4x256xf32, #tpu.memory_space<vmem>>, vector<1x4x256xf32>
    %102 = vector.shape_cast %101 : vector<1x4x256xf32> to vector<4x256xf32>
    %103 = vector.shape_cast %100 : vector<4x256xf32> to vector<1x4x256xf32>
    tpu.vector_store %arg8[%c0_14, %c0_15, %c0_16], %103 {strides = array<i32>} : memref<1x4x256xf32, #tpu.memory_space<vmem>>, vector<1x4x256xf32>,
    %cst_17 = arith.constant dense<0.000000e+00> : vector<4xf32>
    %104 = vector.multi_reduction <add>, %100, %cst_17 [1] : vector<4x256xf32> to vector<4xf32>
    %105 = vector.shape_cast %104 : vector<4xf32> to vector<4x1xf32>
    %106 = arith.mulf %100, %100 : vector<4x256xf32>
    %cst_18 = arith.constant dense<0.000000e+00> : vector<4xf32>
    %107 = vector.multi_reduction <add>, %106, %cst_18 [1] : vector<4x256xf32> to vector<4xf32>
    %108 = vector.shape_cast %107 : vector<4xf32> to vector<4x1xf32>
    %c0_i32 = arith.constant 0 : i32
    %109 = arith.cmpi eq, %arg1, %c0_i32 : i32
    %c0_i32_19 = arith.constant 0 : i32
    %110 = arith.cmpi eq, %arg2, %c0_i32_19 : i32
    %111 = arith.andi %109, %110 : i1
    %112 = arith.extui %111 : i1 to i32
    %c0_i32_20 = arith.constant 0 : i32
    %113 = arith.cmpi ne, %112, %c0_i32_20 : i32
    scf.if %113 {
      %c0_22 = arith.constant 0 : index
      %c0_23 = arith.constant 0 : index
      %c0_24 = arith.constant 0 : index
      %117 = vector.load %arg9[%c0_22, %c0_23, %c0_24] : memref<1x4x1xf32, #tpu.memory_space<vmem>>, vector<1x4x1xf32>
      %118 = vector.shape_cast %117 : vector<1x4x1xf32> to vector<4x1xf32>
      %119 = vector.shape_cast %105 : vector<4x1xf32> to vector<1x4x1xf32>
      tpu.vector_store %arg9[%c0_22, %c0_23, %c0_24], %119 {strides = array<i32>} : memref<1x4x1xf32, #tpu.memory_space<vmem>>, vector<1x4x1xf32>,
      %c0_25 = arith.constant 0 : index
      %c0_26 = arith.constant 0 : index
      %c0_27 = arith.constant 0 : index
      %120 = vector.load %arg10[%c0_25, %c0_26, %c0_27] : memref<1x4x1xf32, #tpu.memory_space<vmem>>, vector<1x4x1xf32>
      %121 = vector.shape_cast %120 : vector<1x4x1xf32> to vector<4x1xf32>
      %122 = vector.shape_cast %108 : vector<4x1xf32> to vector<1x4x1xf32>
      tpu.vector_store %arg10[%c0_25, %c0_26, %c0_27], %122 {strides = array<i32>} : memref<1x4x1xf32, #tpu.memory_space<vmem>>, vector<1x4x1xf32>,
    } else {
    }
    %true = arith.constant true
    %114 = arith.xori %111, %true : i1
    %115 = arith.extui %114 : i1 to i32
    %c0_i32_21 = arith.constant 0 : i32
    %116 = arith.cmpi ne, %115, %c0_i32_21 : i32
    scf.if %116 {
      %c0_22 = arith.constant 0 : index
      %c0_23 = arith.constant 0 : index
      %c0_24 = arith.constant 0 : index
      %117 = vector.load %arg9[%c0_22, %c0_23, %c0_24] : memref<1x4x1xf32, #tpu.memory_space<vmem>>, vector<1x4x1xf32>
      %118 = vector.shape_cast %117 : vector<1x4x1xf32> to vector<4x1xf32>
      %119 = arith.addf %118, %105 : vector<4x1xf32>
      %c0_25 = arith.constant 0 : index
      %c0_26 = arith.constant 0 : index
      %c0_27 = arith.constant 0 : index
      %120 = vector.load %arg9[%c0_25, %c0_26, %c0_27] : memref<1x4x1xf32, #tpu.memory_space<vmem>>, vector<1x4x1xf32>
      %121 = vector.shape_cast %120 : vector<1x4x1xf32> to vector<4x1xf32>
      %122 = vector.shape_cast %119 : vector<4x1xf32> to vector<1x4x1xf32>
      tpu.vector_store %arg9[%c0_25, %c0_26, %c0_27], %122 {strides = array<i32>} : memref<1x4x1xf32, #tpu.memory_space<vmem>>, vector<1x4x1xf32>,
      %c0_28 = arith.constant 0 : index
      %c0_29 = arith.constant 0 : index
      %c0_30 = arith.constant 0 : index
      %123 = vector.load %arg10[%c0_28, %c0_29, %c0_30] : memref<1x4x1xf32, #tpu.memory_space<vmem>>, vector<1x4x1xf32>
      %124 = vector.shape_cast %123 : vector<1x4x1xf32> to vector<4x1xf32>
      %125 = arith.addf %124, %108 : vector<4x1xf32>
      %c0_31 = arith.constant 0 : index
      %c0_32 = arith.constant 0 : index
      %c0_33 = arith.constant 0 : index
      %126 = vector.load %arg10[%c0_31, %c0_32, %c0_33] : memref<1x4x1xf32, #tpu.memory_space<vmem>>, vector<1x4x1xf32>
      %127 = vector.shape_cast %126 : vector<1x4x1xf32> to vector<4x1xf32>
      %128 = vector.shape_cast %125 : vector<4x1xf32> to vector<1x4x1xf32>
      tpu.vector_store %arg10[%c0_31, %c0_32, %c0_33], %128 {strides = array<i32>} : memref<1x4x1xf32, #tpu.memory_space<vmem>>, vector<1x4x1xf32>,
    } else {
    }
    return
  }
  func.func @transform_0(%arg0: i32, %arg1: i32, %arg2: i32) -> (i32, i32, i32) {
    %c1_i32 = arith.constant 1 : i32
    %0 = arith.muli %arg0, %c1_i32 : i32
    %1 = arith.addi %0, %arg1 : i32
    %c0_i32 = arith.constant 0 : i32
    %c0_i32_0 = arith.constant 0 : i32
    return %1, %c0_i32, %arg2 : i32, i32, i32
  }
  func.func @transform_1(%arg0: i32, %arg1: i32, %arg2: i32) -> (i32, i32, i32) {
    %c1_i32 = arith.constant 1 : i32
    %0 = arith.muli %arg0, %c1_i32 : i32
    %1 = arith.addi %0, %arg1 : i32
    %c0_i32 = arith.constant 0 : i32
    %c0_i32_0 = arith.constant 0 : i32
    return %1, %c0_i32, %arg2 : i32, i32, i32
  }
  func.func @transform_2(%arg0: i32, %arg1: i32, %arg2: i32) -> (i32, i32, i32) {
    %c1_i32 = arith.constant 1 : i32
    %0 = arith.muli %arg0, %c1_i32 : i32
    %1 = arith.addi %0, %arg1 : i32
    %c0_i32 = arith.constant 0 : i32
    %c0_i32_0 = arith.constant 0 : i32
    return %1, %c0_i32, %arg2 : i32, i32, i32
  }
  func.func @transform_3(%arg0: i32, %arg1: i32, %arg2: i32) -> (i32, i32) {
    %c0_i32 = arith.constant 0 : i32
    %c0_i32_0 = arith.constant 0 : i32
    %c0_i32_1 = arith.constant 0 : i32
    return %c0_i32, %c0_i32_0 : i32, i32
  }
  func.func @transform_4(%arg0: i32, %arg1: i32, %arg2: i32) -> (i32, i32) {
    %c0_i32 = arith.constant 0 : i32
    %c0_i32_0 = arith.constant 0 : i32
    %c0_i32_1 = arith.constant 0 : i32
    return %c0_i32, %c0_i32_0 : i32, i32
  }
  func.func @transform_5(%arg0: i32, %arg1: i32, %arg2: i32) -> (i32, i32, i32) {
    %c1_i32 = arith.constant 1 : i32
    %0 = arith.muli %arg0, %c1_i32 : i32
    %1 = arith.addi %0, %arg1 : i32
    %c0_i32 = arith.constant 0 : i32
    %c0_i32_0 = arith.constant 0 : i32
    return %1, %c0_i32, %arg2 : i32, i32, i32
  }
  func.func @transform_6(%arg0: i32, %arg1: i32, %arg2: i32) -> (i32, i32, i32) {
    %c0_i32 = arith.constant 0 : i32
    %c0_i32_0 = arith.constant 0 : i32
    %c0_i32_1 = arith.constant 0 : i32
    return %arg0, %c0_i32, %c0_i32_0 : i32, i32, i32
  }
  func.func @transform_7(%arg0: i32, %arg1: i32, %arg2: i32) -> (i32, i32, i32) {
    %c0_i32 = arith.constant 0 : i32
    %c0_i32_0 = arith.constant 0 : i32
    %c0_i32_1 = arith.constant 0 : i32
    return %arg0, %c0_i32, %c0_i32_0 : i32, i32, i32
  }
}

</mosaic_0001>

<llo_original>
// kernel: tpu_custom_call.1
$region0: #{tpu_custom_call.1}
  #allocation0 [shape = 'u32[]', space=smem, size = 0x4, offset = 0x4, fixed_abs, tag = 'smem constant byte address 0x4 - core index']
  #allocation1 [shape = 'u32[144,128]{1,0:T(1,128)}', space=vmem, size = 0x12000, scoped, tag = 'internal scratch']
  %s0 = inlined_call_operand.hbm [shape: f32[2,4,256], index: 0, kind: input, shape index: {}]
  %s1 = inlined_call_operand.hbm [shape: f32[2,4,256], index: 1, kind: input, shape index: {}]
  %s2 = inlined_call_operand.hbm [shape: f32[2,4,256], index: 2, kind: input, shape index: {}]
  %s3 = inlined_call_operand.vmem [shape: f32[4,12], index: 3, kind: input, shape index: {}]
  %s4 = inlined_call_operand.vmem [shape: f32[4,1], index: 4, kind: input, shape index: {}]
  %s5 = inlined_call_operand.hbm [shape: f32[2,4,256], index: 5, kind: output, shape index: {0}]
  %s6 = inlined_call_operand.vmem [shape: f32[2,4,1], index: 6, kind: output, shape index: {1}]
  %s7 = inlined_call_operand.vmem [shape: f32[2,4,1], index: 7, kind: output, shape index: {2}]
  %8 = xla_tuple %s5, %s6, %s7
  %s9 = sld [smem:[#allocation0]]
  $region89: #{tpu_custom_call.1} parent=0
    _
  %s11 = ssub.s32 1, %s9
  %s12 = scalar_select 0, %s11, %s9
  $region1: #{tpu_custom_call.1} parent=0
    #allocation2 [shape = 'u8[8192]{0}', space=vmem, size = 0x2000, scoped, tag = 'input window, operand 0']
    #allocation3 [shape = 's32[2]{0}', space=sflag, size = 0x8, scoped, tag = 'scoped memory for tpu_custom_call.1']
    #allocation4 [shape = 's32[2]{0}', space=sflag, size = 0x8, scoped, tag = 'scoped memory for tpu_custom_call.1']
    #allocation5 [shape = 'u8[8192]{0}', space=vmem, size = 0x2000, scoped, tag = 'input window, operand 1']
    #allocation6 [shape = 's32[2]{0}', space=sflag, size = 0x8, scoped, tag = 'scoped memory for tpu_custom_call.1']
    #allocation7 [shape = 'u8[8192]{0}', space=vmem, size = 0x2000, scoped, tag = 'input window, operand 2']
    #allocation8 [shape = 'u8[8192]{0}', space=vmem, size = 0x2000, scoped, tag = 'output window, operand 0']
    %13 = vsyncpa [#allocation3], 0
    %s14 = scalar_lea.sflag [#allocation3], 1
    %15 = vsyncpa %s14, 0
    %16 = vsyncpa [#allocation6], 0
    %s17 = scalar_lea.sflag [#allocation6], 1
    %18 = vsyncpa %s17, 0
    %19 = vsyncpa [#allocation4], 0
    %s20 = scalar_lea.sflag [#allocation4], 1
    %21 = vsyncpa %s20, 0
    loop: start=0, step=1, limit=4
    $region2: #{tpu_custom_call.1} parent=1 // loop_pre_header
      _
    $region3: #{tpu_custom_call.1} parent=1 // loop_header
      %s23 = sphi 0, %s27
      %p24 = scmp.ge.s32.totalorder %s23, 4
      %s30 = sphi 0, %s49
      %s31 = sphi 0, %s45
      %s32 = sphi 0, %s41
      %s33 = sphi 0, %s30
      %s34 = sphi 0, %s31
      %s35 = sphi 0, %s32
      %s36 = sphi 0, %s33
      %s37 = sphi 0, %s34
      %s38 = sphi 0, %s35
      %s56 = sphi 0, %s58
      %s59 = sphi 0, %s56
      %s60 = sphi 0, %s59
      %s76 = sphi 0, %s60
      %s86 = sphi 0, %s88
      %s89 = sphi 0, %s86
      %s90 = sphi 0, %s89
      %s106 = sphi 0, %s90
      %s116 = sphi 0, %s118
      %s119 = sphi 0, %s116
      %s120 = sphi 0, %s119
      %s136 = sphi 0, %s120
      %s140 = sphi 0, %s140
      %s142 = sphi 0, %s140
      %s143 = sphi 0, %s142
      %s157 = sphi 0, %s143
      %s161 = sphi 0, %s161
      %s163 = sphi 0, %s161
      %s164 = sphi 0, %s163
      %s178 = sphi 0, %s164
      %s188 = sphi 0, %s190
      %s191 = sphi 0, %s188
      %s192 = sphi 0, %s191
      %s208 = sphi 0, %s192
      %s214 = sphi 0, %s216
      %s217 = sphi 0, %s214
      %s218 = sphi 0, %s217
      %s234 = sphi 0, %s218
      %s240 = sphi 0, %s242
      %s243 = sphi 0, %s240
      %s244 = sphi 0, %s243
      %s260 = sphi 0, %s244
    $region4: #{tpu_custom_call.1} parent=1 // loop_header_branch
      %26 = sbr.rel (%p24) target = $region8
    $region5: #{tpu_custom_call.1} parent=1 // loop_body
      %s28 = ssub.s32 %s23, 1
      %s29 = ssub.s32 %s23, 2
      %s39 = sadd.s32 1, %s32
      %p40 = scmp.ge.s32.totalorder %s39, 1
      %s41 = scalar_select %p40, 0, %s39
      %s42 = sadd.s32 1, %s31
      %s43 = scalar_select %p40, %s42, %s31
      %p44 = scmp.ge.s32.totalorder %s43, 1
      %s45 = scalar_select %p44, 0, %s43
      %s46 = sadd.s32 1, %s30
      %s47 = scalar_select %p44, %s46, %s30
      %p48 = scmp.ge.s32.totalorder %s47, 2
      %s49 = scalar_select %p48, 0, %s47
      %s50 = sadd.s32 %s30, %s31
      %s51 = sadd.s32 %s49, %s45
      %s52 = ssub.s32 %s50, %s51
      %s53 = ssub.s32 %s32, %s41
      %s54 = sor.u32 %s52, %s53
      %p55 = scmp.eq.s32.totalorder %s54, 0
      %s57 = sadd.s32 %s56, 1
      %s58 = scalar_select %p55, %s56, %s57
      %p61 = pneg %p55
      %p62 = scmp.eq.s32.totalorder %s23, 1
      %p63 = por %p61, %p62
      %p64 = scmp.ne.s32.totalorder %s56, %s59
      %p65 = scmp.eq.s32.totalorder %s23, 0
      %p66 = por %p64, %p65
      %p67 = scmp.ne.s32.totalorder %s56, %s59
      %p68 = scmp.eq.s32.totalorder %s28, 1
      %p69 = por %p67, %p68
      %p70 = scmp.ne.s32.totalorder %s59, %s60
      %p71 = scmp.eq.s32.totalorder %s28, 0
      %p72 = por %p70, %p71
      %p73 = scmp.ne.s32.totalorder %s59, %s60
      %p74 = scmp.eq.s32.totalorder %s29, 1
      %p75 = por %p73, %p74
      %p77 = scmp.ne.s32.totalorder %s60, %s76
      %p78 = scmp.eq.s32.totalorder %s29, 0
      %p79 = por %p77, %p78
      %s80 = sadd.s32 %s30, %s31
      %s81 = sadd.s32 %s49, %s45
      %s82 = ssub.s32 %s80, %s81
      %s83 = ssub.s32 %s32, %s41
      %s84 = sor.u32 %s82, %s83
      %p85 = scmp.eq.s32.totalorder %s84, 0
      %s87 = sadd.s32 %s86, 1
      %s88 = scalar_select %p85, %s86, %s87
      %p91 = pneg %p85
      %p92 = scmp.eq.s32.totalorder %s23, 1
      %p93 = por %p91, %p92
      %p94 = scmp.ne.s32.totalorder %s86, %s89
      %p95 = scmp.eq.s32.totalorder %s23, 0
      %p96 = por %p94, %p95
      %p97 = scmp.ne.s32.totalorder %s86, %s89
      %p98 = scmp.eq.s32.totalorder %s28, 1
      %p99 = por %p97, %p98
      %p100 = scmp.ne.s32.totalorder %s89, %s90
      %p101 = scmp.eq.s32.totalorder %s28, 0
      %p102 = por %p100, %p101
      %p103 = scmp.ne.s32.totalorder %s89, %s90
      %p104 = scmp.eq.s32.totalorder %s29, 1
      %p105 = por %p103, %p104
      %p107 = scmp.ne.s32.totalorder %s90, %s106
      %p108 = scmp.eq.s32.totalorder %s29, 0
      %p109 = por %p107, %p108
      %s110 = sadd.s32 %s30, %s31
      %s111 = sadd.s32 %s49, %s45
      %s112 = ssub.s32 %s110, %s111
      %s113 = ssub.s32 %s32, %s41
      %s114 = sor.u32 %s112, %s113
      %p115 = scmp.eq.s32.totalorder %s114, 0
      %s117 = sadd.s32 %s116, 1
      %s118 = scalar_select %p115, %s116, %s117
      %p121 = pneg %p115
      %p122 = scmp.eq.s32.totalorder %s23, 1
      %p123 = por %p121, %p122
      %p124 = scmp.ne.s32.totalorder %s116, %s119
      %p125 = scmp.eq.s32.totalorder %s23, 0
      %p126 = por %p124, %p125
      %p127 = scmp.ne.s32.totalorder %s116, %s119
      %p128 = scmp.eq.s32.totalorder %s28, 1
      %p129 = por %p127, %p128
      %p130 = scmp.ne.s32.totalorder %s119, %s120
      %p131 = scmp.eq.s32.totalorder %s28, 0
      %p132 = por %p130, %p131
      %p133 = scmp.ne.s32.totalorder %s119, %s120
      %p134 = scmp.eq.s32.totalorder %s29, 1
      %p135 = por %p133, %p134
      %p137 = scmp.ne.s32.totalorder %s120, %s136
      %p138 = scmp.eq.s32.totalorder %s29, 0
      %p139 = por %p137, %p138
      %s141 = sadd.s32 %s140, 1
      %p144 = scmp.eq.s32.totalorder %s23, 1
      %p145 = scmp.ne.s32.totalorder %s140, %s142
      %p146 = scmp.eq.s32.totalorder %s23, 0
      %p147 = por %p145, %p146
      %p148 = scmp.ne.s32.totalorder %s140, %s142
      %p149 = scmp.eq.s32.totalorder %s28, 1
      %p150 = por %p148, %p149
      %p151 = scmp.ne.s32.totalorder %s142, %s143
      %p152 = scmp.eq.s32.totalorder %s28, 0
      %p153 = por %p151, %p152
      %p154 = scmp.ne.s32.totalorder %s142, %s143
      %p155 = scmp.eq.s32.totalorder %s29, 1
      %p156 = por %p154, %p155
      %p158 = scmp.ne.s32.totalorder %s143, %s157
      %p159 = scmp.eq.s32.totalorder %s29, 0
      %p160 = por %p158, %p159
      %s162 = sadd.s32 %s161, 1
      %p165 = scmp.eq.s32.totalorder %s23, 1
      %p166 = scmp.ne.s32.totalorder %s161, %s163
      %p167 = scmp.eq.s32.totalorder %s23, 0
      %p168 = por %p166, %p167
      %p169 = scmp.ne.s32.totalorder %s161, %s163
      %p170 = scmp.eq.s32.totalorder %s28, 1
      %p171 = por %p169, %p170
      %p172 = scmp.ne.s32.totalorder %s163, %s164
      %p173 = scmp.eq.s32.totalorder %s28, 0
      %p174 = por %p172, %p173
      %p175 = scmp.ne.s32.totalorder %s163, %s164
      %p176 = scmp.eq.s32.totalorder %s29, 1
      %p177 = por %p175, %p176
      %p179 = scmp.ne.s32.totalorder %s164, %s178
      %p180 = scmp.eq.s32.totalorder %s29, 0
      %p181 = por %p179, %p180
      %s182 = sadd.s32 %s30, %s31
      %s183 = sadd.s32 %s49, %s45
      %s184 = ssub.s32 %s182, %s183
      %s185 = ssub.s32 %s32, %s41
      %s186 = sor.u32 %s184, %s185
      %p187 = scmp.eq.s32.totalorder %s186, 0
      %s189 = sadd.s32 %s188, 1
      %s190 = scalar_select %p187, %s188, %s189
      %p193 = pneg %p187
      %p194 = scmp.eq.s32.totalorder %s23, 1
      %p195 = por %p193, %p194
      %p196 = scmp.ne.s32.totalorder %s188, %s191
      %p197 = scmp.eq.s32.totalorder %s23, 0
      %p198 = por %p196, %p197
      %p199 = scmp.ne.s32.totalorder %s188, %s191
      %p200 = scmp.eq.s32.totalorder %s28, 1
      %p201 = por %p199, %p200
      %p202 = scmp.ne.s32.totalorder %s191, %s192
      %p203 = scmp.eq.s32.totalorder %s28, 0
      %p204 = por %p202, %p203
      %p205 = scmp.ne.s32.totalorder %s191, %s192
      %p206 = scmp.eq.s32.totalorder %s29, 1
      %p207 = por %p205, %p206
      %p209 = scmp.ne.s32.totalorder %s192, %s208
      %p210 = scmp.eq.s32.totalorder %s29, 0
      %p211 = por %p209, %p210
      %s212 = ssub.s32 %s30, %s49
      %p213 = scmp.eq.s32.totalorder %s212, 0
      %s215 = sadd.s32 %s214, 1
      %s216 = scalar_select %p213, %s214, %s215
      %p219 = pneg %p213
      %p220 = scmp.eq.s32.totalorder %s23, 1
      %p221 = por %p219, %p220
      %p222 = scmp.ne.s32.totalorder %s214, %s217
      %p223 = scmp.eq.s32.totalorder %s23, 0
      %p224 = por %p222, %p223
      %p225 = scmp.ne.s32.totalorder %s214, %s217
      %p226 = scmp.eq.s32.totalorder %s28, 1
      %p227 = por %p225, %p226
      %p228 = scmp.ne.s32.totalorder %s217, %s218
      %p229 = scmp.eq.s32.totalorder %s28, 0
      %p230 = por %p228, %p229
      %p231 = scmp.ne.s32.totalorder %s217, %s218
      %p232 = scmp.eq.s32.totalorder %s29, 1
      %p233 = por %p231, %p232
      %p235 = scmp.ne.s32.totalorder %s218, %s234
      %p236 = scmp.eq.s32.totalorder %s29, 0
      %p237 = por %p235, %p236
      %s238 = ssub.s32 %s30, %s49
      %p239 = scmp.eq.s32.totalorder %s238, 0
      %s241 = sadd.s32 %s240, 1
      %s242 = scalar_select %p239, %s240, %s241
      %p245 = pneg %p239
      %p246 = scmp.eq.s32.totalorder %s23, 1
      %p247 = por %p245, %p246
      %p248 = scmp.ne.s32.totalorder %s240, %s243
      %p249 = scmp.eq.s32.totalorder %s23, 0
      %p250 = por %p248, %p249
      %p251 = scmp.ne.s32.totalorder %s240, %s243
      %p252 = scmp.eq.s32.totalorder %s28, 1
      %p253 = por %p251, %p252
      %p254 = scmp.ne.s32.totalorder %s243, %s244
      %p255 = scmp.eq.s32.totalorder %s28, 0
      %p256 = por %p254, %p255
      %p257 = scmp.ne.s32.totalorder %s243, %s244
      %p258 = scmp.eq.s32.totalorder %s29, 1
      %p259 = por %p257, %p258
      %p261 = scmp.ne.s32.totalorder %s244, %s260
      %p262 = scmp.eq.s32.totalorder %s29, 0
      %p263 = por %p261, %p262
      %p264 = scmp.le.s32.totalorder 1, %s23
      %p265 = scmp.lt.s32.totalorder %s23, 3
      %p266 = pnand %p264, %p265
      %p267 = pneg %p266
      // Predicated region
      $region9: #{tpu_custom_call.1} parent=5 // pred_check
        _
      $region10: #{tpu_custom_call.1} parent=5 // pred_check_branch
        %269 = sbr.rel (%p266) target = $region12
      $region11: #{tpu_custom_call.1} parent=5 // pred_region
        %s270 = ssub.s32 %s23, 1
        // Predicated region
        $region13: #{tpu_custom_call.1} parent=11 // pred_check
          %p271 = pneg %p153
        $region14: #{tpu_custom_call.1} parent=11 // pred_check_branch
          %273 = sbr.rel (%p271) target = $region16
        $region15: #{tpu_custom_call.1} parent=11 // pred_region
          _
        $region16: #{tpu_custom_call.1} parent=11 // pred_fallthru
          _
        // Predicated region
        $region17: #{tpu_custom_call.1} parent=11 // pred_check
          %p274 = pneg %p174
        $region18: #{tpu_custom_call.1} parent=11 // pred_check_branch
          %276 = sbr.rel (%p274) target = $region20
        $region19: #{tpu_custom_call.1} parent=11 // pred_region
          _
        $region20: #{tpu_custom_call.1} parent=11 // pred_fallthru
          _
      $region12: #{tpu_custom_call.1} parent=5 // pred_fallthru
        _
      %p277 = scmp.lt.s32.totalorder %s23, 2
      // Predicated region
      $region21: #{tpu_custom_call.1} parent=5 // pred_check
        %p278 = pneg %p277
      $region22: #{tpu_custom_call.1} parent=5 // pred_check_branch
        %280 = sbr.rel (%p278) target = $region24
      $region23: #{tpu_custom_call.1} parent=5 // pred_region
        // Predicated region
        $region25: #{tpu_custom_call.1} parent=23 // pred_check
          %p281 = pneg %p66
        $region26: #{tpu_custom_call.1} parent=23 // pred_check_branch
          %283 = sbr.rel (%p281) target = $region28
        $region27: #{tpu_custom_call.1} parent=23 // pred_region
          %s284 = sand.u32 %s56, 1
          %s285 = scalar_lea.sflag [#allocation3], %s284
          %s286 = sand.u32 %s56, 1
          %s287 = smul.addr %s286, 8
          %s288 = scalar_lea.vmem [#allocation2], %s287
          %s289 = sadd.s32 %s30, %s31
          %s290 = smul.u32 2, %s32
          %s292 = ssub.s32 128, 128
          %293 = vsyncadd %s285, %s292
          %s294 = smul.addr %s289, 2
          %s295 = sadd.s32 %s290, %s294
          %s296 = smul.addr %s295, 64
          %s297 = scalar_lea.hbm %s0, %s296
          %s299 = sshll.u32 %s288, 4
          %s300 = int_to_ptr.vmem [resolvable:$true] %s299
          %302 = dma.hbm_to_vmem [thread:$0]  %s297, 128, %s300, %s285
        $region28: #{tpu_custom_call.1} parent=23 // pred_fallthru
          _
        // Predicated region
        $region29: #{tpu_custom_call.1} parent=23 // pred_check
          %p303 = pneg %p96
        $region30: #{tpu_custom_call.1} parent=23 // pred_check_branch
          %305 = sbr.rel (%p303) target = $region32
        $region31: #{tpu_custom_call.1} parent=23 // pred_region
          %s306 = sand.u32 %s23, 1
          %s307 = scalar_lea.sflag [#allocation6], %s306
          %s308 = sand.u32 %s86, 1
          %s309 = smul.addr %s308, 8
          %s310 = scalar_lea.vmem [#allocation5], %s309
          %s311 = sadd.s32 %s30, %s31
          %s312 = smul.u32 2, %s32
          %s314 = ssub.s32 128, 128
          %315 = vsyncadd %s307, %s314
          %s316 = smul.addr %s311, 2
          %s317 = sadd.s32 %s312, %s316
          %s318 = smul.addr %s317, 64
          %s319 = scalar_lea.hbm %s1, %s318
          %s321 = sshll.u32 %s310, 4
          %s322 = int_to_ptr.vmem [resolvable:$true] %s321
          %324 = dma.hbm_to_vmem [thread:$0]  %s319, 128, %s322, %s307
        $region32: #{tpu_custom_call.1} parent=23 // pred_fallthru
          _
        // Predicated region
        $region33: #{tpu_custom_call.1} parent=23 // pred_check
          %p325 = pneg %p126
        $region34: #{tpu_custom_call.1} parent=23 // pred_check_branch
          %327 = sbr.rel (%p325) target = $region36
        $region35: #{tpu_custom_call.1} parent=23 // pred_region
          %s328 = sand.u32 %s23, 1
          %s329 = scalar_lea.sflag [#allocation6], %s328
          %s330 = sand.u32 %s116, 1
          %s331 = smul.addr %s330, 8
          %s332 = scalar_lea.vmem [#allocation7], %s331
          %s333 = sadd.s32 %s30, %s31
          %s334 = smul.u32 2, %s32
          %s336 = ssub.s32 128, 128
          %337 = vsyncadd %s329, %s336
          %s338 = smul.addr %s333, 2
          %s339 = sadd.s32 %s334, %s338
          %s340 = smul.addr %s339, 64
          %s341 = scalar_lea.hbm %s2, %s340
          %s343 = sshll.u32 %s332, 4
          %s344 = int_to_ptr.vmem [resolvable:$true] %s343
          %346 = dma.hbm_to_vmem [thread:$0]  %s341, 128, %s344, %s329
        $region36: #{tpu_custom_call.1} parent=23 // pred_fallthru
          _
      $region24: #{tpu_custom_call.1} parent=5 // pred_fallthru
        _
      %p347 = scmp.le.s32.totalorder 1, %s23
      %p348 = scmp.lt.s32.totalorder %s23, 3
      %p349 = pnand %p347, %p348
      %p350 = pneg %p349
      // Predicated region
      $region37: #{tpu_custom_call.1} parent=5 // pred_check
        _
      $region38: #{tpu_custom_call.1} parent=5 // pred_check_branch
        %352 = sbr.rel (%p349) target = $region40
      $region39: #{tpu_custom_call.1} parent=5 // pred_region
        %s353 = ssub.s32 %s23, 1
        %s354 = sand.u32 %s59, 1
        %s355 = scalar_lea.sflag [#allocation3], %s354
        %s356 = sand.u32 %s59, 1
        %s357 = smul.addr %s356, 8
        %s358 = scalar_lea.vmem [#allocation2], %s357
        // Predicated region
        $region41: #{tpu_custom_call.1} parent=39 // pred_check
          %p359 = pneg %p72
        $region42: #{tpu_custom_call.1} parent=39 // pred_check_branch
          %361 = sbr.rel (%p359) target = $region44
        $region43: #{tpu_custom_call.1} parent=39 // pred_region
          %362 = dma.done %s355, 128
        $region44: #{tpu_custom_call.1} parent=39 // pred_fallthru
          _
        %s363 = sand.u32 %s28, 1
        %s364 = scalar_lea.sflag [#allocation6], %s363
        %s365 = sand.u32 %s89, 1
        %s366 = smul.addr %s365, 8
        %s367 = scalar_lea.vmem [#allocation5], %s366
        // Predicated region
        $region45: #{tpu_custom_call.1} parent=39 // pred_check
          %p368 = pneg %p102
        $region46: #{tpu_custom_call.1} parent=39 // pred_check_branch
          %370 = sbr.rel (%p368) target = $region48
        $region47: #{tpu_custom_call.1} parent=39 // pred_region
          %371 = dma.done %s364, 128
        $region48: #{tpu_custom_call.1} parent=39 // pred_fallthru
          _
        %s372 = sand.u32 %s28, 1
        %s373 = scalar_lea.sflag [#allocation6], %s372
        %s374 = sand.u32 %s119, 1
        %s375 = smul.addr %s374, 8
        %s376 = scalar_lea.vmem [#allocation7], %s375
        // Predicated region
        $region49: #{tpu_custom_call.1} parent=39 // pred_check
          %p377 = pneg %p132
        $region50: #{tpu_custom_call.1} parent=39 // pred_check_branch
          %379 = sbr.rel (%p377) target = $region52
        $region51: #{tpu_custom_call.1} parent=39 // pred_region
          %380 = dma.done %s373, 128
        $region52: #{tpu_custom_call.1} parent=39 // pred_fallthru
          _
        %s381 = sand.u32 %s59, 1
        %s382 = scalar_lea.sflag [#allocation3], %s381
        %s383 = sand.u32 %s59, 1
        %s384 = smul.addr %s383, 8
        %s385 = scalar_lea.vmem [#allocation2], %s384
        %p386 = pneg %p72
        %p387 = pneg %p69
        %s388 = sand.u32 %s28, 1
        %s389 = scalar_lea.sflag [#allocation6], %s388
        %s390 = sand.u32 %s89, 1
        %s391 = smul.addr %s390, 8
        %s392 = scalar_lea.vmem [#allocation5], %s391
        %p393 = pneg %p102
        %p394 = pneg %p99
        %s395 = sand.u32 %s28, 1
        %s396 = scalar_lea.sflag [#allocation6], %s395
        %s397 = sand.u32 %s119, 1
        %s398 = smul.addr %s397, 8
        %s399 = scalar_lea.vmem [#allocation7], %s398
        %p400 = pneg %p132
        %p401 = pneg %p129
        %p402 = pneg %p153
        %p403 = pneg %p150
        %p404 = pneg %p174
        %p405 = pneg %p171
        %p406 = pneg %p204
        %p407 = pneg %p201
        %s408 = sand.u32 %s191, 1
        %s409 = scalar_lea.sflag [#allocation4], %s408
        %s410 = sand.u32 %s191, 1
        %s411 = smul.addr %s410, 8
        %s412 = scalar_lea.vmem [#allocation8], %s411
        %p413 = pneg %p230
        %p414 = pneg %p227
        %p415 = scmp.lt.s32.totalorder %s33, 1
        %s416 = scalar_select %p415, %s33, 1
        %s417 = smul.addr %s416, 4
        %s418 = scalar_lea.vmem %s6, %s417
        %p419 = pneg %p256
        %p420 = pneg %p253
        %p421 = scmp.lt.s32.totalorder %s33, 1
        %s422 = scalar_select %p421, %s33, 1
        %s423 = smul.addr %s422, 4
        %s424 = scalar_lea.vmem %s7, %s423
        %s425 = sadd.s32 %s33, %s34
        %s426 = smul.u32 2, %s35
        %s427 = sadd.s32 %s33, %s34
        %s428 = smul.u32 2, %s35
        %s429 = sadd.s32 %s33, %s34
        %s430 = smul.u32 2, %s35
        %s431 = sadd.s32 %s33, %s34
        %s432 = smul.u32 2, %s35
        %p433 = scmp.lt.s32.totalorder %s33, 1
        %s434 = scalar_select %p433, %s33, 1
        %s435 = smul.addr %s434, 4
        %s436 = scalar_lea.vmem %s6, %s435
        %p437 = scmp.lt.s32.totalorder %s33, 1
        %s438 = scalar_select %p437, %s33, 1
        %s439 = smul.addr %s438, 4
        %s440 = scalar_lea.vmem %s7, %s439
        %v441 = vld [vmem:[%s3] sm:$0xf]
        %v442 = vld [vmem:[%s358] sm:$0xff]
        %v444 = vlaneseq
        %v445 = vshrl.u32 %v444, 7
        %v446 = vsub.s32 0, %v445
        %v447 = vrot.slane %v442, %v446
        %v448 = vlaneseq
        %v449 = vshrl.u32 %v448, 7
        %v450 = vsub.s32 4, %v449
        %v451 = vrot.slane %v442, %v450
        %v454 = vlaneseq
        %v455 = vshrl.u32 %v454, 7
        %v456 = vsub.s32 0, %v455
        %v457 = vrot.slane %v447, %v456
        %v458 = vlaneseq
        %v459 = vshrl.u32 %v458, 7
        %v460 = vsub.s32 0, %v459
        %v461 = vrot.slane %v451, %v460
        %463 = vset.pattern.permute.xlu0 0
        %464 = vperm.xlu0 %463, %v441
        %v465 = vpop.permute.xlu0 %464
        %v467 = vmul.f32 %v465, %v457
        %v468 = vmul.f32 %v465, %v461
        %v469 = vlaneseq
        %v470 = vshrl.u32 %v469, 7
        %v471 = vsub.s32 1, %v470
        %v472 = vrot.slane %v442, %v471
        %v473 = vlaneseq
        %v474 = vshrl.u32 %v473, 7
        %v475 = vsub.s32 5, %v474
        %v476 = vrot.slane %v442, %v475
        %v479 = vlaneseq
        %v480 = vshrl.u32 %v479, 7
        %v481 = vsub.s32 1, %v480
        %v482 = vrot.slane %v472, %v481
        %v483 = vlaneseq
        %v484 = vshrl.u32 %v483, 7
        %v485 = vsub.s32 1, %v484
        %v486 = vrot.slane %v476, %v485
        %487 = vset.pattern.permute.xlu0 1
        %488 = vperm.xlu0 %487, %v441
        %v489 = vpop.permute.xlu0 %488
        %v491 = vmul.f32 %v489, %v482
        %v492 = vmul.f32 %v489, %v486
        %v493 = vadd.f32 %v467, %v491
        %v494 = vadd.f32 %v468, %v492
        %v495 = vlaneseq
        %v496 = vshrl.u32 %v495, 7
        %v497 = vsub.s32 2, %v496
        %v498 = vrot.slane %v442, %v497
        %v499 = vlaneseq
        %v500 = vshrl.u32 %v499, 7
        %v501 = vsub.s32 6, %v500
        %v502 = vrot.slane %v442, %v501
        %v505 = vlaneseq
        %v506 = vshrl.u32 %v505, 7
        %v507 = vsub.s32 2, %v506
        %v508 = vrot.slane %v498, %v507
        %v509 = vlaneseq
        %v510 = vshrl.u32 %v509, 7
        %v511 = vsub.s32 2, %v510
        %v512 = vrot.slane %v502, %v511
        %513 = vset.pattern.permute.xlu0 2
        %514 = vperm.xlu0 %513, %v441
        %v515 = vpop.permute.xlu0 %514
        %v517 = vmul.f32 %v515, %v508
        %v518 = vmul.f32 %v515, %v512
        %v519 = vadd.f32 %v493, %v517
        %v520 = vadd.f32 %v494, %v518
        %v521 = vlaneseq
        %v522 = vshrl.u32 %v521, 7
        %v523 = vsub.s32 3, %v522
        %v524 = vrot.slane %v442, %v523
        %v525 = vlaneseq
        %v526 = vshrl.u32 %v525, 7
        %v527 = vsub.s32 7, %v526
        %v528 = vrot.slane %v442, %v527
        %v531 = vlaneseq
        %v532 = vshrl.u32 %v531, 7
        %v533 = vsub.s32 3, %v532
        %v534 = vrot.slane %v524, %v533
        %v535 = vlaneseq
        %v536 = vshrl.u32 %v535, 7
        %v537 = vsub.s32 3, %v536
        %v538 = vrot.slane %v528, %v537
        %539 = vset.pattern.permute.xlu0 3
        %540 = vperm.xlu0 %539, %v441
        %v541 = vpop.permute.xlu0 %540
        %v543 = vmul.f32 %v541, %v534
        %v544 = vmul.f32 %v541, %v538
        %v545 = vadd.f32 %v519, %v543
        %v546 = vadd.f32 %v520, %v544
        %v547 = vld [vmem:[%s367] sm:$0xff]
        %v549 = vlaneseq
        %v550 = vshrl.u32 %v549, 7
        %v551 = vsub.s32 0, %v550
        %v552 = vrot.slane %v547, %v551
        %v553 = vlaneseq
        %v554 = vshrl.u32 %v553, 7
        %v555 = vsub.s32 4, %v554
        %v556 = vrot.slane %v547, %v555
        %v559 = vlaneseq
        %v560 = vshrl.u32 %v559, 7
        %v561 = vsub.s32 0, %v560
        %v562 = vrot.slane %v552, %v561
        %v563 = vlaneseq
        %v564 = vshrl.u32 %v563, 7
        %v565 = vsub.s32 0, %v564
        %v566 = vrot.slane %v556, %v565
        %567 = vset.pattern.permute.xlu0 4
        %568 = vperm.xlu0 %567, %v441
        %v569 = vpop.permute.xlu0 %568
        %v571 = vmul.f32 %v569, %v562
        %v572 = vmul.f32 %v569, %v566
        %v573 = vadd.f32 %v545, %v571
        %v574 = vadd.f32 %v546, %v572
        %v575 = vlaneseq
        %v576 = vshrl.u32 %v575, 7
        %v577 = vsub.s32 1, %v576
        %v578 = vrot.slane %v547, %v577
        %v579 = vlaneseq
        %v580 = vshrl.u32 %v579, 7
        %v581 = vsub.s32 5, %v580
        %v582 = vrot.slane %v547, %v581
        %v585 = vlaneseq
        %v586 = vshrl.u32 %v585, 7
        %v587 = vsub.s32 1, %v586
        %v588 = vrot.slane %v578, %v587
        %v589 = vlaneseq
        %v590 = vshrl.u32 %v589, 7
        %v591 = vsub.s32 1, %v590
        %v592 = vrot.slane %v582, %v591
        %593 = vset.pattern.permute.xlu0 5
        %594 = vperm.xlu0 %593, %v441
        %v595 = vpop.permute.xlu0 %594
        %v597 = vmul.f32 %v595, %v588
        %v598 = vmul.f32 %v595, %v592
        %v599 = vadd.f32 %v573, %v597
        %v600 = vadd.f32 %v574, %v598
        %v601 = vlaneseq
        %v602 = vshrl.u32 %v601, 7
        %v603 = vsub.s32 2, %v602
        %v604 = vrot.slane %v547, %v603
        %v605 = vlaneseq
        %v606 = vshrl.u32 %v605, 7
        %v607 = vsub.s32 6, %v606
        %v608 = vrot.slane %v547, %v607
        %v611 = vlaneseq
        %v612 = vshrl.u32 %v611, 7
        %v613 = vsub.s32 2, %v612
        %v614 = vrot.slane %v604, %v613
        %v615 = vlaneseq
        %v616 = vshrl.u32 %v615, 7
        %v617 = vsub.s32 2, %v616
        %v618 = vrot.slane %v608, %v617
        %619 = vset.pattern.permute.xlu0 6
        %620 = vperm.xlu0 %619, %v441
        %v621 = vpop.permute.xlu0 %620
        %v623 = vmul.f32 %v621, %v614
        %v624 = vmul.f32 %v621, %v618
        %v625 = vadd.f32 %v599, %v623
        %v626 = vadd.f32 %v600, %v624
        %v627 = vlaneseq
        %v628 = vshrl.u32 %v627, 7
        %v629 = vsub.s32 3, %v628
        %v630 = vrot.slane %v547, %v629
        %v631 = vlaneseq
        %v632 = vshrl.u32 %v631, 7
        %v633 = vsub.s32 7, %v632
        %v634 = vrot.slane %v547, %v633
        %v637 = vlaneseq
        %v638 = vshrl.u32 %v637, 7
        %v639 = vsub.s32 3, %v638
        %v640 = vrot.slane %v630, %v639
        %v641 = vlaneseq
        %v642 = vshrl.u32 %v641, 7
        %v643 = vsub.s32 3, %v642
        %v644 = vrot.slane %v634, %v643
        %645 = vset.pattern.permute.xlu0 7
        %646 = vperm.xlu0 %645, %v441
        %v647 = vpop.permute.xlu0 %646
        %v649 = vmul.f32 %v647, %v640
        %v650 = vmul.f32 %v647, %v644
        %v651 = vadd.f32 %v625, %v649
        %v652 = vadd.f32 %v626, %v650
        %v653 = vld [vmem:[%s376] sm:$0xff]
        %v655 = vlaneseq
        %v656 = vshrl.u32 %v655, 7
        %v657 = vsub.s32 0, %v656
        %v658 = vrot.slane %v653, %v657
        %v659 = vlaneseq
        %v660 = vshrl.u32 %v659, 7
        %v661 = vsub.s32 4, %v660
        %v662 = vrot.slane %v653, %v661
        %v665 = vlaneseq
        %v666 = vshrl.u32 %v665, 7
        %v667 = vsub.s32 0, %v666
        %v668 = vrot.slane %v658, %v667
        %v669 = vlaneseq
        %v670 = vshrl.u32 %v669, 7
        %v671 = vsub.s32 0, %v670
        %v672 = vrot.slane %v662, %v671
        %673 = vset.pattern.permute.xlu0 8
        %674 = vperm.xlu0 %673, %v441
        %v675 = vpop.permute.xlu0 %674
        %v677 = vmul.f32 %v675, %v668
        %v678 = vmul.f32 %v675, %v672
        %v679 = vadd.f32 %v651, %v677
        %v680 = vadd.f32 %v652, %v678
        %v681 = vlaneseq
        %v682 = vshrl.u32 %v681, 7
        %v683 = vsub.s32 1, %v682
        %v684 = vrot.slane %v653, %v683
        %v685 = vlaneseq
        %v686 = vshrl.u32 %v685, 7
        %v687 = vsub.s32 5, %v686
        %v688 = vrot.slane %v653, %v687
        %v691 = vlaneseq
        %v692 = vshrl.u32 %v691, 7
        %v693 = vsub.s32 1, %v692
        %v694 = vrot.slane %v684, %v693
        %v695 = vlaneseq
        %v696 = vshrl.u32 %v695, 7
        %v697 = vsub.s32 1, %v696
        %v698 = vrot.slane %v688, %v697
        %699 = vset.pattern.permute.xlu0 9
        %700 = vperm.xlu0 %699, %v441
        %v701 = vpop.permute.xlu0 %700
        %v703 = vmul.f32 %v701, %v694
        %v704 = vmul.f32 %v701, %v698
        %v705 = vadd.f32 %v679, %v703
        %v706 = vadd.f32 %v680, %v704
        %v707 = vlaneseq
        %v708 = vshrl.u32 %v707, 7
        %v709 = vsub.s32 2, %v708
        %v710 = vrot.slane %v653, %v709
        %v711 = vlaneseq
        %v712 = vshrl.u32 %v711, 7
        %v713 = vsub.s32 6, %v712
        %v714 = vrot.slane %v653, %v713
        %v717 = vlaneseq
        %v718 = vshrl.u32 %v717, 7
        %v719 = vsub.s32 2, %v718
        %v720 = vrot.slane %v710, %v719
        %v721 = vlaneseq
        %v722 = vshrl.u32 %v721, 7
        %v723 = vsub.s32 2, %v722
        %v724 = vrot.slane %v714, %v723
        %725 = vset.pattern.permute.xlu0 10
        %726 = vperm.xlu0 %725, %v441
        %v727 = vpop.permute.xlu0 %726
        %v729 = vmul.f32 %v727, %v720
        %v730 = vmul.f32 %v727, %v724
        %v731 = vadd.f32 %v705, %v729
        %v732 = vadd.f32 %v706, %v730
        %v733 = vlaneseq
        %v734 = vshrl.u32 %v733, 7
        %v735 = vsub.s32 3, %v734
        %v736 = vrot.slane %v653, %v735
        %v737 = vlaneseq
        %v738 = vshrl.u32 %v737, 7
        %v739 = vsub.s32 7, %v738
        %v740 = vrot.slane %v653, %v739
        %v743 = vlaneseq
        %v744 = vshrl.u32 %v743, 7
        %v745 = vsub.s32 3, %v744
        %v746 = vrot.slane %v736, %v745
        %v747 = vlaneseq
        %v748 = vshrl.u32 %v747, 7
        %v749 = vsub.s32 3, %v748
        %v750 = vrot.slane %v740, %v749
        %751 = vset.pattern.permute.xlu0 11
        %752 = vperm.xlu0 %751, %v441
        %v753 = vpop.permute.xlu0 %752
        %v755 = vmul.f32 %v753, %v746
        %v756 = vmul.f32 %v753, %v750
        %v757 = vadd.f32 %v731, %v755
        %v758 = vadd.f32 %v732, %v756
        %v759 = vld [vmem:[%s4] sm:$0xf]
        %761 = vset.pattern.permute.xlu0 0
        %762 = vperm.xlu0 %761, %v759
        %v763 = vpop.permute.xlu0 %762
        %v765 = vadd.f32 %v757, %v763
        %v766 = vadd.f32 %v758, %v763
        %v767 = vmul.f32 %v765, 0.5
        %v768 = vmul.f32 %v766, 0.5
        %v769 = vmul.f32 %v765, 0.70710677
        %v770 = vmul.f32 %v766, 0.70710677
        %v771 = verf.f32.pop %v769
        %v772 = verf.f32.pop %v770
        %v773 = vadd.f32 %v771, 1.0
        %v774 = vadd.f32 %v772, 1.0
        %v775 = vmul.f32 %v767, %v773
        %v776 = vmul.f32 %v768, %v774
        %v779 = vcombine.low %v775, %v776
        %781 = vst [vmem:[%s412] sm:$0xff] %v779
        %vm782 = vcmask 1043456
        %v783 = vsel %vm782, %v775, 0.0
        %v784 = vsel %vm782, %v776, 0.0
        %v785 = vadd.f32 %v783, %v784
        %786 = vadd.xlane.f32.xlu0 %v785
        %v787 = vpop.xlane.xlu0 %786
        %v788 = vmul.f32 %v775, %v775
        %v789 = vmul.f32 %v776, %v776
        %v790 = vsel %vm782, %v788, 0.0
        %v791 = vsel %vm782, %v789, 0.0
        %v792 = vadd.f32 %v790, %v791
        %793 = vadd.xlane.f32.xlu0 %v792
        %v794 = vpop.xlane.xlu0 %793
        %p795 = scmp.eq.s32.totalorder %s34, 0
        %p796 = scmp.eq.s32.totalorder %s35, 0
        %p797 = pnand %p795, %p796
        %p798 = pneg %p797
        // Predicated region
        $region53: #{tpu_custom_call.1} parent=39 // pred_check
          _
        $region54: #{tpu_custom_call.1} parent=39 // pred_check_branch
          %800 = sbr.rel (%p797) target = $region56
        $region55: #{tpu_custom_call.1} parent=39 // pred_region
          %vm801 = vcmask 3072
          %802 = vst.msk [vmem:[%s436] sm:$0xf] %vm801, %v787
          %803 = vst.msk [vmem:[%s440] sm:$0xf] %vm801, %v794
        $region56: #{tpu_custom_call.1} parent=39 // pred_fallthru
          _
        %p804 = pneg %p798
        // Predicated region
        $region57: #{tpu_custom_call.1} parent=39 // pred_check
          _
        $region58: #{tpu_custom_call.1} parent=39 // pred_check_branch
          %806 = sbr.rel (%p798) target = $region60
        $region59: #{tpu_custom_call.1} parent=39 // pred_region
          %v807 = vld [vmem:[%s436] sm:$0xf]
          %v808 = vadd.f32 %v807, %v787
          %vm809 = vcmask 3072
          %810 = vst.msk [vmem:[%s436] sm:$0xf] %vm809, %v808
          %v811 = vld [vmem:[%s440] sm:$0xf]
          %v812 = vadd.f32 %v811, %v794
          %813 = vst.msk [vmem:[%s440] sm:$0xf] %vm809, %v812
        $region60: #{tpu_custom_call.1} parent=39 // pred_fallthru
          _
        %s814 = sand.u32 %s191, 1
        %s815 = scalar_lea.sflag [#allocation4], %s814
        %s816 = sand.u32 %s191, 1
        %s817 = smul.addr %s816, 8
        %s818 = scalar_lea.vmem [#allocation8], %s817
        %p819 = scmp.lt.s32.totalorder %s33, 1
        %s820 = scalar_select %p819, %s33, 1
        %s821 = smul.addr %s820, 4
        %s822 = scalar_lea.vmem %s6, %s821
        %p823 = scmp.lt.s32.totalorder %s33, 1
        %s824 = scalar_select %p823, %s33, 1
        %s825 = smul.addr %s824, 4
        %s826 = scalar_lea.vmem %s7, %s825
        // Predicated region
        $region61: #{tpu_custom_call.1} parent=39 // pred_check
          %p827 = pneg %p201
        $region62: #{tpu_custom_call.1} parent=39 // pred_check_branch
          %829 = sbr.rel (%p827) target = $region64
        $region63: #{tpu_custom_call.1} parent=39 // pred_region
          %s830 = sadd.s32 %s33, %s34
          %s831 = smul.u32 2, %s35
          %s833 = ssub.s32 128, 128
          %834 = vsyncadd %s815, %s833
          %s835 = smul.addr %s830, 2
          %s836 = sadd.s32 %s831, %s835
          %s837 = smul.addr %s836, 64
          %s838 = scalar_lea.hbm %s5, %s837
          %s840 = sshll.u32 %s818, 4
          %s841 = int_to_ptr.vmem [resolvable:$true] %s840
          %843 = dma.vmem_to_hbm [thread:$0]  %s841, 128, %s838, %s815
        $region64: #{tpu_custom_call.1} parent=39 // pred_fallthru
          _
        // Predicated region
        $region65: #{tpu_custom_call.1} parent=39 // pred_check
          %p844 = pneg %p227
        $region66: #{tpu_custom_call.1} parent=39 // pred_check_branch
          %846 = sbr.rel (%p844) target = $region68
        $region67: #{tpu_custom_call.1} parent=39 // pred_region
          _
        $region68: #{tpu_custom_call.1} parent=39 // pred_fallthru
          _
        // Predicated region
        $region69: #{tpu_custom_call.1} parent=39 // pred_check
          %p847 = pneg %p253
        $region70: #{tpu_custom_call.1} parent=39 // pred_check_branch
          %849 = sbr.rel (%p847) target = $region72
        $region71: #{tpu_custom_call.1} parent=39 // pred_region
          _
        $region72: #{tpu_custom_call.1} parent=39 // pred_fallthru
          _
      $region40: #{tpu_custom_call.1} parent=5 // pred_fallthru
        _
      %p850 = scmp.le.s32.totalorder 2, %s23
      // Predicated region
      $region73: #{tpu_custom_call.1} parent=5 // pred_check
        %p851 = pneg %p850
      $region74: #{tpu_custom_call.1} parent=5 // pred_check_branch
        %853 = sbr.rel (%p851) target = $region76
      $region75: #{tpu_custom_call.1} parent=5 // pred_region
        %s854 = ssub.s32 %s23, 2
        // Predicated region
        $region77: #{tpu_custom_call.1} parent=75 // pred_check
          %p855 = pneg %p207
        $region78: #{tpu_custom_call.1} parent=75 // pred_check_branch
          %857 = sbr.rel (%p855) target = $region80
        $region79: #{tpu_custom_call.1} parent=75 // pred_region
          %s858 = sand.u32 %s192, 1
          %s859 = scalar_lea.sflag [#allocation4], %s858
          %s860 = sand.u32 %s192, 1
          %s861 = smul.addr %s860, 8
          %s862 = scalar_lea.vmem [#allocation8], %s861
          %863 = dma.done %s859, 128
        $region80: #{tpu_custom_call.1} parent=75 // pred_fallthru
          _
        // Predicated region
        $region81: #{tpu_custom_call.1} parent=75 // pred_check
          %p864 = pneg %p233
        $region82: #{tpu_custom_call.1} parent=75 // pred_check_branch
          %866 = sbr.rel (%p864) target = $region84
        $region83: #{tpu_custom_call.1} parent=75 // pred_region
          %p867 = scmp.lt.s32.totalorder %s36, 1
          %s868 = scalar_select %p867, %s36, 1
          %s869 = smul.addr %s868, 4
          %s870 = scalar_lea.vmem %s6, %s869
        $region84: #{tpu_custom_call.1} parent=75 // pred_fallthru
          _
        // Predicated region
        $region85: #{tpu_custom_call.1} parent=75 // pred_check
          %p871 = pneg %p259
        $region86: #{tpu_custom_call.1} parent=75 // pred_check_branch
          %873 = sbr.rel (%p871) target = $region88
        $region87: #{tpu_custom_call.1} parent=75 // pred_region
          %p874 = scmp.lt.s32.totalorder %s36, 1
          %s875 = scalar_select %p874, %s36, 1
          %s876 = smul.addr %s875, 4
          %s877 = scalar_lea.vmem %s7, %s876
        $region88: #{tpu_custom_call.1} parent=75 // pred_fallthru
          _
      $region76: #{tpu_custom_call.1} parent=5 // pred_fallthru
        _
    $region6: #{tpu_custom_call.1} parent=1 // loop_footer
      %s27 = sadd.s32 1, %s23
    $region7: #{tpu_custom_call.1} parent=1 // loop_footer_branch
      %22 = sbr.rel target = $region3
    $region8: #{tpu_custom_call.1} parent=1 // loop_exit
      _
    %878 = vsyncpa [#allocation3], 1
    %s879 = scalar_lea.sflag [#allocation3], 1
    %880 = vsyncpa %s879, 1
    %881 = vsyncpa [#allocation6], 1
    %s882 = scalar_lea.sflag [#allocation6], 1
    %883 = vsyncpa %s882, 1
    %884 = vsyncpa [#allocation4], 1
    %s885 = scalar_lea.sflag [#allocation4], 1
    %886 = vsyncpa %s885, 1

</llo_original>
